<compile_context>
chip_gen: v6e
topology: v6e:2x2x1
jax: 0.10.0
libtpu: 0.0.40
codegen_flags: <defaults>
</compile_context>

<pallas_src>
import functools

import jax
import jax.numpy as jnp
from jax.experimental import pallas as pl
from jax.experimental.pallas import tpu as pltpu


def _round_up(x: int, m: int) -> int:
    return (x + m - 1) // m * m


def _matmul_bias_kernel(x_ref, wT_ref, b_ref, o_ref, acc_ref):
    """Computes one (tm, tn) output tile; grid axis 2 is the K reduction."""
    k = pl.program_id(2)

    @pl.when(k == 0)
    def _():
        acc_ref[...] = jnp.zeros_like(acc_ref)

    # Weight is pre-transposed to (K, N) in the wrapper -> feed the MXU
    # directly, f32 accumulation.
    acc_ref[...] += jnp.dot(x_ref[...], wT_ref[...],
                            preferred_element_type=jnp.float32)

    @pl.when(k == pl.num_programs(2) - 1)
    def _():
        o_ref[...] = (acc_ref[...] + b_ref[...]).astype(o_ref.dtype)


@functools.partial(jax.jit, static_argnames=("tm", "tn", "tk"))
def reference_linear(x, w, a1=None, a2=None, bias=None, *, tm=512, tn=512, tk=512):
    """x: (..., K) -> (..., N).  Single fused matmul + bias runs in Pallas."""
    orig_shape = x.shape
    K = orig_shape[-1]
    N = w.shape[0]
    x2d = x.reshape(-1, K)
    M = x2d.shape[0]

    # Fold the low-rank adapter into the dense weight (exact algebraic identity):
    #   x @ W.T + (x @ A1.T) @ A2.T == x @ (W + A2 @ A1).T
    # The fold is O(N*K*r), done once per weight set, not per token tile.
    w_eff = w
    if a1 is not None and a2 is not None:
        w_eff = w + jnp.dot(a2, a1, preferred_element_type=w.dtype)
    wT = w_eff.T                                   # (K, N), lane-dense in N
    if bias is None:
        bias = jnp.zeros((N,), dtype=x.dtype)

    # ---- Tile selection + lane/sublane-dense padding -------------------------
    Kp = _round_up(K, 128)
    Np = _round_up(N, 128)
    tk_b = min(tk, Kp)                             # multiples of 128
    tn_b = min(tn, Np)
    Kp = _round_up(Kp, tk_b)
    Np = _round_up(Np, tn_b)
    tm_b = min(tm, _round_up(M, 8))                # multiple of 8 (f32 sublanes)
    Mp = _round_up(M, tm_b)

    x_pad = jnp.pad(x2d, ((0, Mp - M), (0, Kp - K)))
    wT_pad = jnp.pad(wT, ((0, Kp - K), (0, Np - N)))
    b_pad = jnp.pad(bias.reshape(1, N).astype(jnp.float32), ((0, 0), (0, Np - N)))

    grid = (Mp // tm_b, Np // tn_b, Kp // tk_b)

    # VMEM budget (double-buffered x / W / out + f32 accumulator + bias),
    # kept well inside v7x's 64 MiB; clamp the scoped limit to a safe range.
    itemsize = jnp.dtype(x.dtype).itemsize
    step_bytes = (2 * tm_b * tk_b * itemsize       # x tile (double buffered)
                  + 2 * tk_b * tn_b * itemsize     # W tile
                  + 2 * tm_b * tn_b * itemsize     # out tile
                  + tm_b * tn_b * 4                # f32 accumulator scratch
                  + 2 * tn_b * 4)                  # bias tile
    vmem_limit = min(max(2 * step_bytes, 32 * 1024 * 1024), 48 * 1024 * 1024)

    out = pl.pallas_call(
        _matmul_bias_kernel,
        out_shape=jax.ShapeDtypeStruct((Mp, Np), x.dtype),
        grid_spec=pltpu.PrefetchScalarGridSpec(
            num_scalar_prefetch=0,
            grid=grid,
            in_specs=[
                pl.BlockSpec((tm_b, tk_b), lambda i, j, k: (i, k)),   # x tile
                pl.BlockSpec((tk_b, tn_b), lambda i, j, k: (k, j)),   # W.T tile
                pl.BlockSpec((1, tn_b), lambda i, j, k: (0, j)),      # bias tile
            ],
            out_specs=pl.BlockSpec((tm_b, tn_b), lambda i, j, k: (i, j)),
            scratch_shapes=[pltpu.VMEM((tm_b, tn_b), jnp.float32)],
        ),
        compiler_params=pltpu.CompilerParams(
            dimension_semantics=("parallel", "parallel", "arbitrary"),
            vmem_limit_bytes=int(vmem_limit),
        ),
    )(x_pad, wT_pad, b_pad)

    return out[:M, :N].reshape(*orig_shape[:-1], N)


def reference_linear_jax(x, w, a1, a2, bias):
    """Pure-JAX reference mirroring the PyTorch forward exactly."""
    y = x @ w.T
    if a1 is not None and a2 is not None:
        y = (x @ a1.T) @ a2.T + y
    if bias is not None:
        y = y + bias
    return y


if __name__ == "__main__":
    key = jax.random.PRNGKey(0)
    k_x, k_w, k_a1, k_a2, k_b = jax.random.split(key, 5)

    # Small shapes consistent with the module's forward.
    batch, seq = 2, 8
    in_features, out_features, adapter_dim = 32, 48, 4

    x = jax.random.normal(k_x, (batch, seq, in_features), dtype=jnp.float32)

    # Parameters (PyTorch convention): W (out, in), A1 (r, in), A2 (out, r), bias (out,).
    w = jax.random.normal(k_w, (out_features, in_features), dtype=jnp.float32) * 0.1
    xavier_std = (2.0 / (adapter_dim + in_features)) ** 0.5
    a1 = jax.random.normal(k_a1, (adapter_dim, in_features), dtype=jnp.float32) * xavier_std
    # PyTorch inits adapter_second to zeros; use non-zero values here so the
    # adapter path actually contributes and is verified by the check below.
    a2 = jax.random.normal(k_a2, (out_features, adapter_dim), dtype=jnp.float32) * 0.05
    bias = jax.random.normal(k_b, (out_features,), dtype=jnp.float32) * 0.01

    y = reference_linear(x, w, a1, a2, bias)
    y = jax.block_until_ready(y)

    y_ref = reference_linear_jax(x, w, a1, a2, bias)
    assert y.shape == (batch, seq, out_features), y.shape
    max_err = float(jnp.max(jnp.abs(y - y_ref)))
    assert jnp.allclose(y, y_ref, atol=1e-4, rtol=1e-4), f"mismatch vs JAX reference: {max_err}"

    print("KERNEL_OK")
</pallas_src>

<mosaic_0001>
module attributes {stable_mosaic.version = 11 : i64} {
  func.func @_matmul_bias_kernel(%arg0: i32, %arg1: i32, %arg2: i32, %arg3: memref<16x128xf32, #tpu.memory_space<vmem>>, %arg4: memref<128x128xf32, #tpu.memory_space<vmem>>, %arg5: memref<1x128xf32, #tpu.memory_space<vmem>>, %arg6: memref<16x128xf32, #tpu.memory_space<vmem>>, %arg7: memref<16x128xf32, #tpu.memory_space<vmem>>) attributes {dimension_semantics = [#tpu.dimension_semantics<parallel>, #tpu.dimension_semantics<parallel>, #tpu.dimension_semantics<arbitrary>], iteration_bounds = array<i64: 1, 1, 1>, scalar_prefetch = 0 : i64, scratch_operands = 1 : i64, tpu.core_type = #tpu.core_type<tc>, window_params = [{transform_indices = @transform_0, window_bounds = array<i64: 16, 128>}, {transform_indices = @transform_1, window_bounds = array<i64: 128, 128>}, {transform_indices = @transform_2, window_bounds = array<i64: 1, 128>}, {transform_indices = @transform_3, window_bounds = array<i64: 16, 128>}]} {
    %c0_i32 = arith.constant 0 : i32
    %0 = arith.cmpi eq, %arg2, %c0_i32 : i32
    %1 = arith.extui %0 : i1 to i32
    %c0_i32_0 = arith.constant 0 : i32
    %2 = arith.cmpi ne, %1, %c0_i32_0 : i32
    scf.if %2 {
      %cst_10 = arith.constant 0.000000e+00 : f32
      %12 = vector.broadcast %cst_10 : f32 to vector<16x128xf32>
      %c0_11 = arith.constant 0 : index
      %c0_12 = arith.constant 0 : index
      %13 = vector.load %arg7[%c0_11, %c0_12] : memref<16x128xf32, #tpu.memory_space<vmem>>, vector<16x128xf32>
      tpu.vector_store %arg7[%c0_11, %c0_12], %12 {strides = array<i32>} : memref<16x128xf32, #tpu.memory_space<vmem>>, vector<16x128xf32>,
    } else {
    }
    %c0 = arith.constant 0 : index
    %c0_1 = arith.constant 0 : index
    %3 = vector.load %arg7[%c0, %c0_1] : memref<16x128xf32, #tpu.memory_space<vmem>>, vector<16x128xf32>
    %c0_2 = arith.constant 0 : index
    %c0_3 = arith.constant 0 : index
    %4 = vector.load %arg3[%c0_2, %c0_3] : memref<16x128xf32, #tpu.memory_space<vmem>>, vector<16x128xf32>
    %c0_4 = arith.constant 0 : index
    %c0_5 = arith.constant 0 : index
    %5 = vector.load %arg4[%c0_4, %c0_5] : memref<128x128xf32, #tpu.memory_space<vmem>>, vector<128x128xf32>
    %cst = arith.constant dense<0.000000e+00> : vector<16x128xf32>
    %6 = tpu.matmul %4, %5, %cst {dimension_numbers = #tpu.dot_dimension_numbers<[1], [0], [0], [1], [0, 0, 1, 1], [], []>} : vector<16x128xf32>, vector<128x128xf32>, vector<16x128xf32> -> vector<16x128xf32>
    %7 = arith.addf %3, %6 : vector<16x128xf32>
    %c0_6 = arith.constant 0 : index
    %c0_7 = arith.constant 0 : index
    %8 = vector.load %arg7[%c0_6, %c0_7] : memref<16x128xf32, #tpu.memory_space<vmem>>, vector<16x128xf32>
    tpu.vector_store %arg7[%c0_6, %c0_7], %7 {strides = array<i32>} : memref<16x128xf32, #tpu.memory_space<vmem>>, vector<16x128xf32>,
    %c0_i32_8 = arith.constant 0 : i32
    %9 = arith.cmpi eq, %arg2, %c0_i32_8 : i32
    %10 = arith.extui %9 : i1 to i32
    %c0_i32_9 = arith.constant 0 : i32
    %11 = arith.cmpi ne, %10, %c0_i32_9 : i32
    scf.if %11 {
      %c0_10 = arith.constant 0 : index
      %c0_11 = arith.constant 0 : index
      %12 = vector.load %arg7[%c0_10, %c0_11] : memref<16x128xf32, #tpu.memory_space<vmem>>, vector<16x128xf32>
      %c0_12 = arith.constant 0 : index
      %c0_13 = arith.constant 0 : index
      %13 = vector.load %arg5[%c0_12, %c0_13] : memref<1x128xf32, #tpu.memory_space<vmem>>, vector<1x128xf32>
      %14 = vector.broadcast %13 : vector<1x128xf32> to vector<16x128xf32>
      %15 = arith.addf %12, %14 : vector<16x128xf32>
      %c0_14 = arith.constant 0 : index
      %c0_15 = arith.constant 0 : index
      %16 = vector.load %arg6[%c0_14, %c0_15] : memref<16x128xf32, #tpu.memory_space<vmem>>, vector<16x128xf32>
      tpu.vector_store %arg6[%c0_14, %c0_15], %15 {strides = array<i32>} : memref<16x128xf32, #tpu.memory_space<vmem>>, vector<16x128xf32>,
    } else {
    }
    return
  }
  func.func @transform_0(%arg0: i32, %arg1: i32, %arg2: i32) -> (i32, i32) {
    %c0_i32 = arith.constant 0 : i32
    return %arg0, %arg2 : i32, i32
  }
  func.func @transform_1(%arg0: i32, %arg1: i32, %arg2: i32) -> (i32, i32) {
    %c0_i32 = arith.constant 0 : i32
    return %arg2, %arg1 : i32, i32
  }
  func.func @transform_2(%arg0: i32, %arg1: i32, %arg2: i32) -> (i32, i32) {
    %c0_i32 = arith.constant 0 : i32
    %c0_i32_0 = arith.constant 0 : i32
    return %c0_i32, %arg1 : i32, i32
  }
  func.func @transform_3(%arg0: i32, %arg1: i32, %arg2: i32) -> (i32, i32) {
    %c0_i32 = arith.constant 0 : i32
    return %arg0, %arg1 : i32, i32
  }
}

</mosaic_0001>

<llo_original>
// kernel: reference_linear.1
$region0: #{reference_linear.1}
  #allocation0 [shape = 'u32[]', space=smem, size = 0x4, offset = 0x4, fixed_abs, tag = 'smem constant byte address 0x4 - core index']
  #allocation1 [shape = 'u32[144,128]{1,0:T(1,128)}', space=vmem, size = 0x12000, scoped, tag = 'internal scratch']
  #allocation2 [shape = 'f32[16,128]{1,0:T(8,128)}', space=vmem, size = 0x2000, scoped, tag = 'scratch operand']
  %s0 = inlined_call_operand.vmem [shape: f32[16,128], index: 0, kind: input, shape index: {}]
  %s1 = inlined_call_operand.vmem [shape: f32[128,128], index: 1, kind: input, shape index: {}]
  %s2 = inlined_call_operand.vmem [shape: f32[1,128], index: 2, kind: input, shape index: {}]
  %s3 = inlined_call_operand.vmem [shape: f32[16,128], index: 3, kind: output, shape index: {}]
  %s4 = sld [smem:[#allocation0]]
  $region30: #{reference_linear.1} parent=0
    _
  %s6 = ssub.s32 1, %s4
  %s7 = scalar_select 0, %s6, %s4
  // Predicated region
  $region2: #{reference_linear.1} parent=0 // pred_check
    _
  $region3: #{reference_linear.1} parent=0 // pred_check_branch
    %9 = sbr.rel (0) target = $region5
  $region4: #{reference_linear.1} parent=0 // pred_region
    _
  $region5: #{reference_linear.1} parent=0 // pred_fallthru
    _
  // Predicated region
  $region6: #{reference_linear.1} parent=0 // pred_check
    _
  $region7: #{reference_linear.1} parent=0 // pred_check_branch
    %11 = sbr.rel (0) target = $region9
  $region8: #{reference_linear.1} parent=0 // pred_region
    _
  $region9: #{reference_linear.1} parent=0 // pred_fallthru
    _
  // Predicated region
  $region10: #{reference_linear.1} parent=0 // pred_check
    _
  $region11: #{reference_linear.1} parent=0 // pred_check_branch
    %13 = sbr.rel (0) target = $region13
  $region12: #{reference_linear.1} parent=0 // pred_region
    _
  $region13: #{reference_linear.1} parent=0 // pred_fallthru
    _
  %p14 = scmp.eq.s32.totalorder 0, 0
  // Predicated region
  $region14: #{reference_linear.1} parent=0 // pred_check
    %p15 = pneg %p14
  $region15: #{reference_linear.1} parent=0 // pred_check_branch
    %17 = sbr.rel (%p15) target = $region17
  $region16: #{reference_linear.1} parent=0 // pred_region
    %18 = vst [vmem:[#allocation2] sm:$0xff] 0.0
    %19 = vst [vmem:[#allocation2 + $0x8] sm:$0xff] 0.0
  $region17: #{reference_linear.1} parent=0 // pred_fallthru
    _
  %v20 = vld [vmem:[#allocation2] sm:$0xff]
  %v21 = vld [vmem:[#allocation2 + $0x8] sm:$0xff]
  %v22 = vld [vmem:[%s0] sm:$0xff]
  %v23 = vld [vmem:[%s0 + $0x8] sm:$0xff]
  %v24 = vld [vmem:[%s1] sm:$0xff]
  %v25 = vld [vmem:[%s1 + $0x8] sm:$0xff]
  %v26 = vld [vmem:[%s1 + $0x10] sm:$0xff]
  %v27 = vld [vmem:[%s1 + $0x18] sm:$0xff]
  %v28 = vld [vmem:[%s1 + $0x20] sm:$0xff]
  %v29 = vld [vmem:[%s1 + $0x28] sm:$0xff]
  %v30 = vld [vmem:[%s1 + $0x30] sm:$0xff]
  %v31 = vld [vmem:[%s1 + $0x38] sm:$0xff]
  %v32 = vld [vmem:[%s1 + $0x40] sm:$0xff]
  %v33 = vld [vmem:[%s1 + $0x48] sm:$0xff]
  %v34 = vld [vmem:[%s1 + $0x50] sm:$0xff]
  %v35 = vld [vmem:[%s1 + $0x58] sm:$0xff]
  %v36 = vld [vmem:[%s1 + $0x60] sm:$0xff]
  %v37 = vld [vmem:[%s1 + $0x68] sm:$0xff]
  %v38 = vld [vmem:[%s1 + $0x70] sm:$0xff]
  %v39 = vld [vmem:[%s1 + $0x78] sm:$0xff]
  %40 = vmatprep.subr.mxu0 0.0
  %41 = vmatpush1.msra.mxu0 %v39
  %42 = vmatprep.subr.mxu0 0.0
  %43 = vmatpush1.msra.mxu0 %v38
  %44 = vmatprep.subr.mxu0 0.0
  %45 = vmatpush1.msra.mxu0 %v37
  %46 = vmatprep.subr.mxu0 0.0
  %47 = vmatpush1.msra.mxu0 %v36
  %48 = vmatprep.subr.mxu0 0.0
  %49 = vmatpush1.msra.mxu0 %v35
  %50 = vmatprep.subr.mxu0 0.0
  %51 = vmatpush1.msra.mxu0 %v34
  %52 = vmatprep.subr.mxu0 0.0
  %53 = vmatpush1.msra.mxu0 %v33
  %54 = vmatprep.subr.mxu0 0.0
  %55 = vmatpush1.msra.mxu0 %v32
  %56 = vmatprep.subr.mxu0 0.0
  %57 = vmatpush1.msra.mxu0 %v31
  %58 = vmatprep.subr.mxu0 0.0
  %59 = vmatpush1.msra.mxu0 %v30
  %60 = vmatprep.subr.mxu0 0.0
  %61 = vmatpush1.msra.mxu0 %v29
  %62 = vmatprep.subr.mxu0 0.0
  %63 = vmatpush1.msra.mxu0 %v28
  %64 = vmatprep.subr.mxu0 0.0
  %65 = vmatpush1.msra.mxu0 %v27
  %66 = vmatprep.subr.mxu0 0.0
  %67 = vmatpush1.msra.mxu0 %v26
  %68 = vmatprep.subr.mxu0 0.0
  %69 = vmatpush1.msra.mxu0 %v25
  %70 = vmatprep.subr.mxu0 0.0
  %71 = vmatpush1.msra.mxu0 %v24
  %72 = vmatprep.subr.mxu0 0.0
  %73 = vmatpush2.msra.mxu0 0.0
  %74 = vmatprep.subr.mxu0 0.0
  %75 = vmatpush2.msra.mxu0 0.0
  %76 = vmatprep.subr.mxu0 0.0
  %77 = vmatpush2.msra.mxu0 0.0
  %78 = vmatprep.subr.mxu0 0.0
  %79 = vmatpush2.msra.mxu0 0.0
  %80 = vmatprep.subr.mxu0 0.0
  %81 = vmatpush2.msra.mxu0 0.0
  %82 = vmatprep.subr.mxu0 0.0
  %83 = vmatpush2.msra.mxu0 0.0
  %84 = vmatprep.subr.mxu0 0.0
  %85 = vmatpush2.msra.mxu0 0.0
  %86 = vmatprep.subr.mxu0 0.0
  %87 = vmatpush2.msra.mxu0 0.0
  %88 = vmatprep.subr.mxu0 0.0
  %89 = vmatpush2.msra.mxu0 0.0
  %90 = vmatprep.subr.mxu0 0.0
  %91 = vmatpush2.msra.mxu0 0.0
  %92 = vmatprep.subr.mxu0 0.0
  %93 = vmatpush2.msra.mxu0 0.0
  %94 = vmatprep.subr.mxu0 0.0
  %95 = vmatpush2.msra.mxu0 0.0
  %96 = vmatprep.subr.mxu0 0.0
  %97 = vmatpush2.msra.mxu0 0.0
  %98 = vmatprep.subr.mxu0 0.0
  %99 = vmatpush2.msra.mxu0 0.0
  %100 = vmatprep.subr.mxu0 0.0
  %101 = vmatpush2.msra.mxu0 0.0
  %102 = vmatprep.subr.mxu0 0.0
  %103 = vmatpush2.msra.mxu0 0.0
  %104 = vmatprep.mubr.f32.mxu0 0.0
  %105 = vmatmul.mubr.f32.gmra.mxu0 %v22
  %v106 = vpop.f32.mrf.mxu0
  %v107 = vadd.f32 0.0, %v106
  %v108 = vpop.f32.mrf.mxu0
  %109 = vmatprep.mubr.f32.mxu0 0.0
  %110 = vmatmul.mubr.f32.gmra.mxu0 %v23
  %v111 = vpop.f32.mrf.mxu0
  %v112 = vadd.f32 0.0, %v111
  %v113 = vpop.f32.mrf.mxu0
  %114 = vdwg.mxu0
  %v115 = vadd.f32 %v20, %v107
  %v116 = vadd.f32 %v21, %v112
  %117 = vst [vmem:[#allocation2] sm:$0xff] %v115
  %118 = vst [vmem:[#allocation2 + $0x8] sm:$0xff] %v116
  // Predicated region
  $region18: #{reference_linear.1} parent=0 // pred_check
    %p119 = pneg %p14
  $region19: #{reference_linear.1} parent=0 // pred_check_branch
    %121 = sbr.rel (%p119) target = $region21
  $region20: #{reference_linear.1} parent=0 // pred_region
    %v122 = vld [vmem:[#allocation2] sm:$0xff]
    %v123 = vld [vmem:[#allocation2 + $0x8] sm:$0xff]
    %v124 = vld [vmem:[%s2] sm:$0x1]
    %v126 = vlaneseq
    %v127 = vshrl.u32 %v126, 7
    %v128 = vsub.s32 0, %v127
    %v129 = vrot.slane %v124, %v128
    %v131 = vadd.f32 %v122, %v129
    %v132 = vadd.f32 %v123, %v129
    %133 = vst [vmem:[%s3] sm:$0xff] %v131
    %134 = vst [vmem:[%s3 + $0x8] sm:$0xff] %v132
  $region21: #{reference_linear.1} parent=0 // pred_fallthru
    _
  // Predicated region
  $region22: #{reference_linear.1} parent=0 // pred_check
    _
  $region23: #{reference_linear.1} parent=0 // pred_check_branch
    %136 = sbr.rel (0) target = $region25
  $region24: #{reference_linear.1} parent=0 // pred_region
    _
  $region25: #{reference_linear.1} parent=0 // pred_fallthru
    _
  // Predicated region
  $region26: #{reference_linear.1} parent=0 // pred_check
    _
  $region27: #{reference_linear.1} parent=0 // pred_check_branch
    %138 = sbr.rel (0) target = $region29
  $region28: #{reference_linear.1} parent=0 // pred_region
    _
  $region29: #{reference_linear.1} parent=0 // pred_fallthru
    _

</llo_original>
